<compile_context>
chip_gen: v6e
topology: v6e:2x2x1
jax: 0.10.0
libtpu: 0.0.40
codegen_flags: <defaults>
</compile_context>

<pallas_src>
import jax
import jax.numpy as jnp
from jax.experimental import pallas as pl
from jax.experimental.pallas import tpu as pltpu

VOCAB_SIZE = 50
INPUT_DIM = 16        # embedding dim D
ATTENTION_DIM = 32    # A
NUM_CLASSES = 5       # C

LANE = 128
VOCAB_PAD = 56                          # vocab padded to a multiple of 8
OUT_ROWS = 8                            # output sublane pad (>= B)
ROW_KT = VOCAB_PAD                      # 56: start of K^T table rows
ROW_SEL = VOCAB_PAD + ATTENTION_DIM     # 88: start of last-timestep selector
ROW_MASK = ROW_SEL + OUT_ROWS           # 96: start of additive mask rows
SLAB_ROWS = ROW_MASK + OUT_ROWS         # 104 (multiple of 8)
NEG_INF = -1e30                         # finite 'masked' score (exp -> 0)


def attention_classifier_kernel(idbuf_ref, slab_ref, out_ref):
    A = ATTENTION_DIM
    Vp = VOCAB_PAD
    BS = idbuf_ref.shape[0]             # padded B*S (multiple of 8, <= 128)
    f32 = jnp.float32

    # --- one-hot token gathers, both orientations (VPU; overlaps MXU) -------
    ids_col = idbuf_ref[:, 0:1]                                   # (BS, 1)
    ids_row = idbuf_ref[0:1, :]                                   # (1, 128)
    vocab_lane = jax.lax.broadcasted_iota(jnp.int32, (BS, Vp), 1)
    onehot = (ids_col == vocab_lane).astype(f32)                  # (BS, Vp)
    vocab_sub = jax.lax.broadcasted_iota(jnp.int32, (Vp, LANE), 0)
    onehot_t = (ids_row == vocab_sub).astype(f32)                 # (Vp, 128)

    # --- fused embedding + projection (bias folded per vocab row) -----------
    # lanes [0:A) = Q/sqrt(A), lanes [A:A+C) = V @ Wfc (+ folded biases)
    proj = jnp.dot(onehot, slab_ref[0:Vp, :],
                   preferred_element_type=f32)                    # (BS, 128)

    # --- K^T for every token slot, no runtime transpose (parallel MXU track) -
    k_t = jnp.dot(slab_ref[ROW_KT:ROW_KT + A, 0:Vp], onehot_t,
                  preferred_element_type=f32)                     # (A, 128)

    # --- last-timestep Q rows via precomputed selection matmul --------------
    last_sel = slab_ref[ROW_SEL:ROW_SEL + OUT_ROWS, 0:BS]         # (8, BS)
    q_last = jnp.dot(last_sel, proj,
                     preferred_element_type=f32)[:, 0:A]          # (8, A)

    # --- masked scores for the last query only (mask precomputed) -----------
    scores = jnp.dot(q_last, k_t, preferred_element_type=f32)     # (8, 128)
    scores = scores + slab_ref[ROW_MASK:ROW_MASK + OUT_ROWS, :]

    m = jnp.max(scores, axis=-1, keepdims=True)
    e = jnp.exp(scores - m)
    # exact divide (NOT approx reciprocal): the folded fc bias relies on the
    # attention weights summing to exactly ~1.
    attn = e / jnp.sum(e, axis=-1, keepdims=True)                 # (8, 128)

    # --- attention-weighted sum: logits land in lanes [A:A+C) ---------------
    out_ref[...] = jnp.dot(attn[:, 0:BS], proj, preferred_element_type=f32)


@jax.jit
def attention_text_classifier(ids, slab):
    B, S = ids.shape
    BS = B * S
    assert B <= OUT_ROWS and BS <= LANE, "tile per batch for larger shapes"
    BSp = max(8, -(-BS // 8) * 8)

    # Token ids in both layouts, packed in one tiny int32 buffer:
    #   column 0 -> ids along sublanes (row-form one-hot),
    #   row 0    -> ids along lanes    (transposed one-hot); padding = -1.
    flat = ids.reshape(BS).astype(jnp.int32)
    idbuf = jnp.full((BSp, LANE), -1, jnp.int32)
    idbuf = idbuf.at[:BS, 0].set(flat)
    idbuf = idbuf.at[0, :BS].set(flat)

    vmem = pl.BlockSpec(memory_space=pltpu.MemorySpace.VMEM)
    out_full = pl.pallas_call(
        attention_classifier_kernel,
        out_shape=jax.ShapeDtypeStruct((OUT_ROWS, LANE), jnp.float32),
        in_specs=[vmem, vmem],
        out_specs=vmem,
    )(idbuf, slab)
    return out_full[:B, ATTENTION_DIM:ATTENTION_DIM + NUM_CLASSES]


def init_params(key):
    ks = jax.random.split(key, 9)

    def lin(kw, fan_in, fan_out):
        # shapes match nn.Linear, stored transposed: y = x @ W + b
        return jax.random.normal(kw, (fan_in, fan_out), jnp.float32) / jnp.sqrt(fan_in)

    return {
        "emb": jax.random.normal(ks[0], (VOCAB_SIZE, INPUT_DIM), jnp.float32),
        "wq": lin(ks[1], INPUT_DIM, ATTENTION_DIM),
        "bq": jax.random.normal(ks[2], (1, ATTENTION_DIM), jnp.float32) * 0.01,
        "wk": lin(ks[3], INPUT_DIM, ATTENTION_DIM),
        "bk": jax.random.normal(ks[4], (1, ATTENTION_DIM), jnp.float32) * 0.01,
        "wv": lin(ks[5], INPUT_DIM, ATTENTION_DIM),
        "bv": jax.random.normal(ks[6], (1, ATTENTION_DIM), jnp.float32) * 0.01,
        "wfc": lin(ks[7], ATTENTION_DIM, NUM_CLASSES),
        "bfc": jax.random.normal(ks[8], (1, NUM_CLASSES), jnp.float32) * 0.01,
    }


def pack_params(params, batch, seq):
    """One-time algebraic folds into a single lane-dense (104, 128) slab.

    rows [  0: 56) : fused per-vocab projection table
                       lanes [0:A)   = emb @ (wq/sqrt(A)) + bq/sqrt(A)
                       lanes [A:A+C) = emb @ (wv @ wfc)   + (bv @ wfc + bfc)
    rows [ 56: 88) : K^T table, lanes [0:56) = (emb @ wk + bk)^T
    rows [ 88: 96) : last-timestep selection matrix (rows >= B are zero)
    rows [ 96:104) : additive attention mask (0 = valid, -1e30 = invalid)
    The last two blocks depend only on the static (batch, seq) shape.
    """
    A, C = ATTENTION_DIM, NUM_CLASSES
    B, S = batch, seq
    assert B <= OUT_ROWS and B * S <= LANE, "tile per batch for larger shapes"
    scale = 1.0 / jnp.sqrt(jnp.float32(A))

    emb_pad = jnp.zeros((VOCAB_PAD, INPUT_DIM), jnp.float32)
    emb_pad = emb_pad.at[:VOCAB_SIZE].set(params["emb"])

    # Q (scale folded), V (final fc folded; exact because softmax sums to 1), K.
    q_tab = emb_pad @ (params["wq"] * scale) + params["bq"] * scale   # (Vp, A)
    wvc = params["wv"] @ params["wfc"]                                # (D, C)
    bvc = params["bv"] @ params["wfc"] + params["bfc"]                # (1, C)
    v_tab = emb_pad @ wvc + bvc                                       # (Vp, C)
    k_tab = emb_pad @ params["wk"] + params["bk"]                     # (Vp, A)

    table = jnp.zeros((VOCAB_PAD, LANE), jnp.float32)
    table = table.at[:, 0:A].set(q_tab)
    table = table.at[:, A:A + C].set(v_tab)

    k_t = jnp.zeros((A, LANE), jnp.float32).at[:, :VOCAB_PAD].set(k_tab.T)

    last_sel = jnp.zeros((OUT_ROWS, LANE), jnp.float32)
    mask = jnp.full((OUT_ROWS, LANE), NEG_INF, jnp.float32)
    for b in range(B):
        last_sel = last_sel.at[b, b * S + S - 1].set(1.0)
        mask = mask.at[b, b * S:b * S + S].set(0.0)

    slab = jnp.concatenate([table, k_t, last_sel, mask], axis=0)
    assert slab.shape == (SLAB_ROWS, LANE)
    return slab


def reference_forward(ids, params):
    # Pure-JAX reference mirroring the PyTorch module exactly.
    emb = jnp.take(params["emb"], ids, axis=0)                # (B,S,D)
    Q = emb @ params["wq"] + params["bq"]
    K = emb @ params["wk"] + params["bk"]
    V = emb @ params["wv"] + params["bv"]
    scores = jnp.einsum('bsa,bta->bst', Q, K) / jnp.sqrt(jnp.float32(ATTENTION_DIM))
    attn = jax.nn.softmax(scores, axis=-1)
    out = jnp.einsum('bst,bta->bsa', attn, V)
    return out[:, -1, :] @ params["wfc"] + params["bfc"]


if __name__ == "__main__":
    key = jax.random.PRNGKey(0)
    pkey, ikey = jax.random.split(key)
    params = init_params(pkey)

    B, S = 2, 8
    slab = pack_params(params, B, S)   # one-time fold/pack (static B, S)
    ids = jax.random.randint(ikey, (B, S), 0, VOCAB_SIZE, dtype=jnp.int32)

    logits = attention_text_classifier(ids, slab)
    jax.block_until_ready(logits)

    ref = reference_forward(ids, params)
    assert logits.shape == (B, NUM_CLASSES)
    max_err = float(jnp.max(jnp.abs(logits - ref)))
    assert jnp.allclose(logits, ref, atol=5e-4, rtol=5e-4), max_err

    print("KERNEL_OK")
</pallas_src>

<mosaic_0001>
module attributes {stable_mosaic.version = 11 : i64} {
  func.func @attention_classifier_kernel(%arg0: memref<16x128xi32, #tpu.memory_space<vmem>>, %arg1: memref<104x128xf32, #tpu.memory_space<vmem>>, %arg2: memref<8x128xf32, #tpu.memory_space<vmem>>) attributes {dimension_semantics = [], scalar_prefetch = 0 : i64, scratch_operands = 0 : i64, tpu.core_type = #tpu.core_type<tc>} {
    %c0 = arith.constant 0 : index
    %c0_0 = arith.constant 0 : index
    %0 = vector.load %arg0[%c0, %c0_0] : memref<16x128xi32, #tpu.memory_space<vmem>>, vector<16x1xi32>
    %c0_1 = arith.constant 0 : index
    %c0_2 = arith.constant 0 : index
    %1 = vector.load %arg0[%c0_1, %c0_2] : memref<16x128xi32, #tpu.memory_space<vmem>>, vector<1x128xi32>
    %2 = tpu.iota {dimensions = array<i32: 1>} : vector<16x56xi32>
    %3 = vector.broadcast %0 : vector<16x1xi32> to vector<16x56xi32>
    %4 = arith.cmpi eq, %3, %2 : vector<16x56xi32>
    %5 = arith.extui %4 : vector<16x56xi1> to vector<16x56xi32>
    %6 = arith.sitofp %5 : vector<16x56xi32> to vector<16x56xf32>
    %7 = tpu.iota {dimensions = array<i32: 0>} : vector<56x128xi32>
    %8 = vector.broadcast %1 : vector<1x128xi32> to vector<56x128xi32>
    %9 = arith.cmpi eq, %8, %7 : vector<56x128xi32>
    %10 = arith.extui %9 : vector<56x128xi1> to vector<56x128xi32>
    %11 = arith.sitofp %10 : vector<56x128xi32> to vector<56x128xf32>
    %c0_3 = arith.constant 0 : index
    %c0_4 = arith.constant 0 : index
    %12 = vector.load %arg1[%c0_3, %c0_4] : memref<104x128xf32, #tpu.memory_space<vmem>>, vector<56x128xf32>
    %cst = arith.constant dense<0.000000e+00> : vector<16x128xf32>
    %13 = tpu.matmul %6, %12, %cst {dimension_numbers = #tpu.dot_dimension_numbers<[1], [0], [0], [1], [0, 0, 1, 1], [], []>} : vector<16x56xf32>, vector<56x128xf32>, vector<16x128xf32> -> vector<16x128xf32>
    %c56 = arith.constant 56 : index
    %c0_5 = arith.constant 0 : index
    %14 = vector.load %arg1[%c56, %c0_5] : memref<104x128xf32, #tpu.memory_space<vmem>>, vector<32x56xf32>
    %cst_6 = arith.constant dense<0.000000e+00> : vector<32x128xf32>
    %15 = tpu.matmul %14, %11, %cst_6 {dimension_numbers = #tpu.dot_dimension_numbers<[1], [0], [0], [1], [0, 0, 1, 1], [], []>} : vector<32x56xf32>, vector<56x128xf32>, vector<32x128xf32> -> vector<32x128xf32>
    %c88 = arith.constant 88 : index
    %c0_7 = arith.constant 0 : index
    %16 = vector.load %arg1[%c88, %c0_7] : memref<104x128xf32, #tpu.memory_space<vmem>>, vector<8x16xf32>
    %cst_8 = arith.constant dense<0.000000e+00> : vector<8x128xf32>
    %17 = tpu.matmul %16, %13, %cst_8 {dimension_numbers = #tpu.dot_dimension_numbers<[1], [0], [0], [1], [0, 0, 1, 1], [], []>} : vector<8x16xf32>, vector<16x128xf32>, vector<8x128xf32> -> vector<8x128xf32>
    %18 = vector.extract_strided_slice %17 {offsets = [0, 0], sizes = [8, 32], strides = [1, 1]} : vector<8x128xf32> to vector<8x32xf32>
    %cst_9 = arith.constant dense<0.000000e+00> : vector<8x128xf32>
    %19 = tpu.matmul %18, %15, %cst_9 {dimension_numbers = #tpu.dot_dimension_numbers<[1], [0], [0], [1], [0, 0, 1, 1], [], []>} : vector<8x32xf32>, vector<32x128xf32>, vector<8x128xf32> -> vector<8x128xf32>
    %c96 = arith.constant 96 : index
    %c0_10 = arith.constant 0 : index
    %20 = vector.load %arg1[%c96, %c0_10] : memref<104x128xf32, #tpu.memory_space<vmem>>, vector<8x128xf32>
    %21 = arith.addf %19, %20 : vector<8x128xf32>
    %cst_11 = arith.constant dense<0xFF800000> : vector<8xf32>
    %22 = vector.multi_reduction <maximumf>, %21, %cst_11 [1] : vector<8x128xf32> to vector<8xf32>
    %23 = vector.shape_cast %22 : vector<8xf32> to vector<8x1xf32>
    %24 = vector.broadcast %23 : vector<8x1xf32> to vector<8x128xf32>
    %25 = arith.subf %21, %24 : vector<8x128xf32>
    %26 = math.exp %25 : vector<8x128xf32>
    %cst_12 = arith.constant dense<0.000000e+00> : vector<8xf32>
    %27 = vector.multi_reduction <add>, %26, %cst_12 [1] : vector<8x128xf32> to vector<8xf32>
    %28 = vector.shape_cast %27 : vector<8xf32> to vector<8x1xf32>
    %29 = vector.broadcast %28 : vector<8x1xf32> to vector<8x128xf32>
    %30 = arith.divf %26, %29 : vector<8x128xf32>
    %31 = vector.extract_strided_slice %30 {offsets = [0, 0], sizes = [8, 16], strides = [1, 1]} : vector<8x128xf32> to vector<8x16xf32>
    %cst_13 = arith.constant dense<0.000000e+00> : vector<8x128xf32>
    %32 = tpu.matmul %31, %13, %cst_13 {dimension_numbers = #tpu.dot_dimension_numbers<[1], [0], [0], [1], [0, 0, 1, 1], [], []>} : vector<8x16xf32>, vector<16x128xf32>, vector<8x128xf32> -> vector<8x128xf32>
    %c0_14 = arith.constant 0 : index
    %c0_15 = arith.constant 0 : index
    %33 = vector.load %arg2[%c0_14, %c0_15] : memref<8x128xf32, #tpu.memory_space<vmem>>, vector<8x128xf32>
    tpu.vector_store %arg2[%c0_14, %c0_15], %32 {strides = array<i32>} : memref<8x128xf32, #tpu.memory_space<vmem>>, vector<8x128xf32>,
    return
  }
}

</mosaic_0001>

<llo_original>
// kernel: attention_text_classifier.1
$region0: #{attention_text_classifier.1}
  #allocation0 [shape = 'u32[]', space=smem, size = 0x4, offset = 0x4, fixed_abs, tag = 'smem constant byte address 0x4 - core index']
  #allocation1 [shape = 'u32[144,128]{1,0:T(1,128)}', space=vmem, size = 0x12000, scoped, tag = 'internal scratch']
  %s0 = inlined_call_operand.vmem [shape: s32[16,128], index: 0, kind: input, shape index: {}]
  %s1 = inlined_call_operand.hbm [shape: f32[104,128], index: 1, kind: input, shape index: {}]
  %s2 = inlined_call_operand.vmem [shape: f32[8,128], index: 2, kind: output, shape index: {}]
  %s3 = sld [smem:[#allocation0]]
  $region22: #{attention_text_classifier.1} parent=0
    _
  %s5 = ssub.s32 1, %s3
  %s6 = scalar_select 0, %s5, %s3
  $region1: #{attention_text_classifier.1} parent=0
    #allocation2 [shape = 'u8[53248]{0}', space=vmem, size = 0xd000, scoped, tag = 'input window, operand 1, single buffered']
    #allocation3 [shape = 's32[1]{0}', space=sflag, size = 0x4, scoped, tag = 'scoped memory for attention_text_classifier.1']
    %7 = vsyncpa [#allocation3], 0
    // Predicated region
    $region2: #{attention_text_classifier.1} parent=1 // pred_check
      _
    $region3: #{attention_text_classifier.1} parent=1 // pred_check_branch
      %9 = sbr.rel (0) target = $region5
    $region4: #{attention_text_classifier.1} parent=1 // pred_region
      _
    $region5: #{attention_text_classifier.1} parent=1 // pred_fallthru
      _
    // Predicated region
    $region6: #{attention_text_classifier.1} parent=1 // pred_check
      _
    $region7: #{attention_text_classifier.1} parent=1 // pred_check_branch
      %11 = sbr.rel (0) target = $region9
    $region8: #{attention_text_classifier.1} parent=1 // pred_region
      %s13 = ssub.s32 1664, 1664
      %14 = vsyncadd [#allocation3], %s13
      %s15 = sshll.u32 [#allocation2], 4
      %s16 = int_to_ptr.vmem [resolvable:$true] %s15
      %21 = dma.hbm_to_vmem [thread:$0]  %s1, 1664, %s16, [#allocation3], 128, 128, 8
    $region9: #{attention_text_classifier.1} parent=1 // pred_fallthru
      _
    // Predicated region
    $region10: #{attention_text_classifier.1} parent=1 // pred_check
      _
    $region11: #{attention_text_classifier.1} parent=1 // pred_check_branch
      %23 = sbr.rel (0) target = $region13
    $region12: #{attention_text_classifier.1} parent=1 // pred_region
      %24 = dma.done [#allocation3], 1664
    $region13: #{attention_text_classifier.1} parent=1 // pred_fallthru
      _
    %v25 = vld [vmem:[%s0] sm:$0xff]
    %v26 = vld [vmem:[%s0 + $0x8] sm:$0xff]
    %v27 = vld [vmem:[%s0] sm:$0x1]
    %v28 = vlaneseq
    %v29 = vand.u32 %v28, 127
    %30 = vset.pattern.permute.xlu0 0
    %31 = vperm.xlu0 %30, %v25
    %v32 = vpop.permute.xlu0 %31
    %33 = vset.pattern.permute.xlu0 0
    %34 = vperm.xlu0 %33, %v26
    %v35 = vpop.permute.xlu0 %34
    %vm36 = vcmp.eq.s32.totalorder %v32, %v29
    %vm37 = vcmp.eq.s32.totalorder %v35, %v29
    %v38 = vsel %vm36, 1, 0
    %v39 = vsel %vm37, 1, 0
    %v40 = vcvt.s32.f32 %v38
    %v41 = vcvt.s32.f32 %v39
    %v42 = vlaneseq
    %v43 = vshrl.u32 %v42, 7
    %v44 = vadd.s32 %v43, 8
    %v45 = vadd.s32 %v43, 16
    %v46 = vadd.s32 %v43, 24
    %v47 = vadd.s32 %v43, 32
    %v48 = vadd.s32 %v43, 40
    %v49 = vadd.s32 %v43, 48
    %v50 = vlaneseq
    %v51 = vshrl.u32 %v50, 7
    %v52 = vsub.s32 0, %v51
    %v53 = vrot.slane %v27, %v52
    %vm54 = vcmp.eq.s32.totalorder %v53, %v43
    %vm55 = vcmp.eq.s32.totalorder %v53, %v44
    %vm56 = vcmp.eq.s32.totalorder %v53, %v45
    %vm57 = vcmp.eq.s32.totalorder %v53, %v46
    %vm58 = vcmp.eq.s32.totalorder %v53, %v47
    %vm59 = vcmp.eq.s32.totalorder %v53, %v48
    %vm60 = vcmp.eq.s32.totalorder %v53, %v49
    %v61 = vsel %vm54, 1, 0
    %v62 = vsel %vm55, 1, 0
    %v63 = vsel %vm56, 1, 0
    %v64 = vsel %vm57, 1, 0
    %v65 = vsel %vm58, 1, 0
    %v66 = vsel %vm59, 1, 0
    %v67 = vsel %vm60, 1, 0
    %v68 = vcvt.s32.f32 %v61
    %v69 = vcvt.s32.f32 %v62
    %v70 = vcvt.s32.f32 %v63
    %v71 = vcvt.s32.f32 %v64
    %v72 = vcvt.s32.f32 %v65
    %v73 = vcvt.s32.f32 %v66
    %v74 = vcvt.s32.f32 %v67
    %v75 = vld [vmem:[#allocation2] sm:$0xff]
    %v76 = vld [vmem:[#allocation2 + $0x8] sm:$0xff]
    %v77 = vld [vmem:[#allocation2 + $0x10] sm:$0xff]
    %v78 = vld [vmem:[#allocation2 + $0x18] sm:$0xff]
    %v79 = vld [vmem:[#allocation2 + $0x20] sm:$0xff]
    %v80 = vld [vmem:[#allocation2 + $0x28] sm:$0xff]
    %v81 = vld [vmem:[#allocation2 + $0x30] sm:$0xff]
    %vm82 = vcmask 457728
    %v84 = vsel %vm82, %v40, 0
    %v87 = vsel %vm82, %v41, 0
    %89 = vmatprep.subr.mxu0 0.0
    %90 = vmatpush1.msra.mxu0 0.0
    %91 = vmatprep.subr.mxu0 0.0
    %92 = vmatpush1.msra.mxu0 0.0
    %93 = vmatprep.subr.mxu0 0.0
    %94 = vmatpush1.msra.mxu0 0.0
    %95 = vmatprep.subr.mxu0 0.0
    %96 = vmatpush1.msra.mxu0 0.0
    %97 = vmatprep.subr.mxu0 0.0
    %98 = vmatpush1.msra.mxu0 0.0
    %99 = vmatprep.subr.mxu0 0.0
    %100 = vmatpush1.msra.mxu0 0.0
    %101 = vmatprep.subr.mxu0 0.0
    %102 = vmatpush1.msra.mxu0 0.0
    %103 = vmatprep.subr.mxu0 0.0
    %104 = vmatpush1.msra.mxu0 0.0
    %105 = vmatprep.subr.mxu0 0.0
    %106 = vmatpush1.msra.mxu0 0.0
    %107 = vmatprep.subr.mxu0 0.0
    %108 = vmatpush1.msra.mxu0 %v81
    %109 = vmatprep.subr.mxu0 0.0
    %110 = vmatpush1.msra.mxu0 %v80
    %111 = vmatprep.subr.mxu0 0.0
    %112 = vmatpush1.msra.mxu0 %v79
    %113 = vmatprep.subr.mxu0 0.0
    %114 = vmatpush1.msra.mxu0 %v78
    %115 = vmatprep.subr.mxu0 0.0
    %116 = vmatpush1.msra.mxu0 %v77
    %117 = vmatprep.subr.mxu0 0.0
    %118 = vmatpush1.msra.mxu0 %v76
    %119 = vmatprep.subr.mxu0 0.0
    %120 = vmatpush1.msra.mxu0 %v75
    %121 = vmatprep.subr.mxu0 0.0
    %122 = vmatpush2.msra.mxu0 0.0
    %123 = vmatprep.subr.mxu0 0.0
    %124 = vmatpush2.msra.mxu0 0.0
    %125 = vmatprep.subr.mxu0 0.0
    %126 = vmatpush2.msra.mxu0 0.0
    %127 = vmatprep.subr.mxu0 0.0
    %128 = vmatpush2.msra.mxu0 0.0
    %129 = vmatprep.subr.mxu0 0.0
    %130 = vmatpush2.msra.mxu0 0.0
    %131 = vmatprep.subr.mxu0 0.0
    %132 = vmatpush2.msra.mxu0 0.0
    %133 = vmatprep.subr.mxu0 0.0
    %134 = vmatpush2.msra.mxu0 0.0
    %135 = vmatprep.subr.mxu0 0.0
    %136 = vmatpush2.msra.mxu0 0.0
    %137 = vmatprep.subr.mxu0 0.0
    %138 = vmatpush2.msra.mxu0 0.0
    %139 = vmatprep.subr.mxu0 0.0
    %140 = vmatpush2.msra.mxu0 0.0
    %141 = vmatprep.subr.mxu0 0.0
    %142 = vmatpush2.msra.mxu0 0.0
    %143 = vmatprep.subr.mxu0 0.0
    %144 = vmatpush2.msra.mxu0 0.0
    %145 = vmatprep.subr.mxu0 0.0
    %146 = vmatpush2.msra.mxu0 0.0
    %147 = vmatprep.subr.mxu0 0.0
    %148 = vmatpush2.msra.mxu0 0.0
    %149 = vmatprep.subr.mxu0 0.0
    %150 = vmatpush2.msra.mxu0 0.0
    %151 = vmatprep.subr.mxu0 0.0
    %152 = vmatpush2.msra.mxu0 0.0
    %153 = vmatprep.mubr.f32.mxu0 0.0
    %154 = vmatmul.mubr.f32.gmra.mxu0 %v84
    %v155 = vpop.f32.mrf.mxu0
    %v156 = vadd.f32 0.0, %v155
    %v157 = vpop.f32.mrf.mxu0
    %158 = vmatprep.mubr.f32.mxu0 0.0
    %159 = vmatmul.mubr.f32.gmra.mxu0 %v87
    %v160 = vpop.f32.mrf.mxu0
    %v161 = vadd.f32 0.0, %v160
    %v162 = vpop.f32.mrf.mxu0
    %163 = vdwg.mxu0
    %v164 = vld [vmem:[#allocation2 + $0x38] sm:$0xff]
    %v165 = vld [vmem:[#allocation2 + $0x40] sm:$0xff]
    %v166 = vld [vmem:[#allocation2 + $0x48] sm:$0xff]
    %v167 = vld [vmem:[#allocation2 + $0x50] sm:$0xff]
    %v169 = vsel %vm82, %v164, 0
    %v172 = vsel %vm82, %v165, 0
    %v175 = vsel %vm82, %v166, 0
    %v178 = vsel %vm82, %v167, 0
    %180 = vmatprep.subr.mxu0 0.0
    %181 = vmatpush1.msra.mxu0 0.0
    %182 = vmatprep.subr.mxu0 0.0
    %183 = vmatpush1.msra.mxu0 0.0
    %184 = vmatprep.subr.mxu0 0.0
    %185 = vmatpush1.msra.mxu0 0.0
    %186 = vmatprep.subr.mxu0 0.0
    %187 = vmatpush1.msra.mxu0 0.0
    %188 = vmatprep.subr.mxu0 0.0
    %189 = vmatpush1.msra.mxu0 0.0
    %190 = vmatprep.subr.mxu0 0.0
    %191 = vmatpush1.msra.mxu0 0.0
    %192 = vmatprep.subr.mxu0 0.0
    %193 = vmatpush1.msra.mxu0 0.0
    %194 = vmatprep.subr.mxu0 0.0
    %195 = vmatpush1.msra.mxu0 0.0
    %196 = vmatprep.subr.mxu0 0.0
    %197 = vmatpush1.msra.mxu0 0.0
    %198 = vmatprep.subr.mxu0 0.0
    %199 = vmatpush1.msra.mxu0 %v74
    %200 = vmatprep.subr.mxu0 0.0
    %201 = vmatpush1.msra.mxu0 %v73
    %202 = vmatprep.subr.mxu0 0.0
    %203 = vmatpush1.msra.mxu0 %v72
    %204 = vmatprep.subr.mxu0 0.0
    %205 = vmatpush1.msra.mxu0 %v71
    %206 = vmatprep.subr.mxu0 0.0
    %207 = vmatpush1.msra.mxu0 %v70
    %208 = vmatprep.subr.mxu0 0.0
    %209 = vmatpush1.msra.mxu0 %v69
    %210 = vmatprep.subr.mxu0 0.0
    %211 = vmatpush1.msra.mxu0 %v68
    %212 = vmatprep.subr.mxu0 0.0
    %213 = vmatpush2.msra.mxu0 0.0
    %214 = vmatprep.subr.mxu0 0.0
    %215 = vmatpush2.msra.mxu0 0.0
    %216 = vmatprep.subr.mxu0 0.0
    %217 = vmatpush2.msra.mxu0 0.0
    %218 = vmatprep.subr.mxu0 0.0
    %219 = vmatpush2.msra.mxu0 0.0
    %220 = vmatprep.subr.mxu0 0.0
    %221 = vmatpush2.msra.mxu0 0.0
    %222 = vmatprep.subr.mxu0 0.0
    %223 = vmatpush2.msra.mxu0 0.0
    %224 = vmatprep.subr.mxu0 0.0
    %225 = vmatpush2.msra.mxu0 0.0
    %226 = vmatprep.subr.mxu0 0.0
    %227 = vmatpush2.msra.mxu0 0.0
    %228 = vmatprep.subr.mxu0 0.0
    %229 = vmatpush2.msra.mxu0 0.0
    %230 = vmatprep.subr.mxu0 0.0
    %231 = vmatpush2.msra.mxu0 0.0
    %232 = vmatprep.subr.mxu0 0.0
    %233 = vmatpush2.msra.mxu0 0.0
    %234 = vmatprep.subr.mxu0 0.0
    %235 = vmatpush2.msra.mxu0 0.0
    %236 = vmatprep.subr.mxu0 0.0
    %237 = vmatpush2.msra.mxu0 0.0
    %238 = vmatprep.subr.mxu0 0.0
    %239 = vmatpush2.msra.mxu0 0.0
    %240 = vmatprep.subr.mxu0 0.0
    %241 = vmatpush2.msra.mxu0 0.0
    %242 = vmatprep.subr.mxu0 0.0
    %243 = vmatpush2.msra.mxu0 0.0
    %244 = vmatprep.mubr.f32.mxu0 0.0
    %245 = vmatmul.mubr.f32.gmra.mxu0 %v169
    %v246 = vpop.f32.mrf.mxu0
    %v247 = vadd.f32 0.0, %v246
    %v248 = vpop.f32.mrf.mxu0
    %249 = vmatprep.mubr.f32.mxu0 0.0
    %250 = vmatmul.mubr.f32.gmra.mxu0 %v172
    %v251 = vpop.f32.mrf.mxu0
    %v252 = vadd.f32 0.0, %v251
    %v253 = vpop.f32.mrf.mxu0
    %254 = vmatprep.mubr.f32.mxu0 0.0
    %255 = vmatmul.mubr.f32.gmra.mxu0 %v175
    %v256 = vpop.f32.mrf.mxu0
    %v257 = vadd.f32 0.0, %v256
    %v258 = vpop.f32.mrf.mxu0
    %259 = vmatprep.mubr.f32.mxu0 0.0
    %260 = vmatmul.mubr.f32.gmra.mxu0 %v178
    %v261 = vpop.f32.mrf.mxu0
    %v262 = vadd.f32 0.0, %v261
    %v263 = vpop.f32.mrf.mxu0
    %264 = vdwg.mxu0
    %v265 = vld [vmem:[#allocation2 + $0x58] sm:$0xff]
    %vm266 = vcmask 130048
    %v268 = vsel %vm266, %v265, 0
    %270 = vmatprep.subr.mxu0 0.0
    %271 = vmatpush1.msra.mxu0 0.0
    %272 = vmatprep.subr.mxu0 0.0
    %273 = vmatpush1.msra.mxu0 0.0
    %274 = vmatprep.subr.mxu0 0.0
    %275 = vmatpush1.msra.mxu0 0.0
    %276 = vmatprep.subr.mxu0 0.0
    %277 = vmatpush1.msra.mxu0 0.0
    %278 = vmatprep.subr.mxu0 0.0
    %279 = vmatpush1.msra.mxu0 0.0
    %280 = vmatprep.subr.mxu0 0.0
    %281 = vmatpush1.msra.mxu0 0.0
    %282 = vmatprep.subr.mxu0 0.0
    %283 = vmatpush1.msra.mxu0 0.0
    %284 = vmatprep.subr.mxu0 0.0
    %285 = vmatpush1.msra.mxu0 0.0
    %286 = vmatprep.subr.mxu0 0.0
    %287 = vmatpush1.msra.mxu0 0.0
    %288 = vmatprep.subr.mxu0 0.0
    %289 = vmatpush1.msra.mxu0 0.0
    %290 = vmatprep.subr.mxu0 0.0
    %291 = vmatpush1.msra.mxu0 0.0
    %292 = vmatprep.subr.mxu0 0.0
    %293 = vmatpush1.msra.mxu0 0.0
    %294 = vmatprep.subr.mxu0 0.0
    %295 = vmatpush1.msra.mxu0 0.0
    %296 = vmatprep.subr.mxu0 0.0
    %297 = vmatpush1.msra.mxu0 0.0
    %298 = vmatprep.subr.mxu0 0.0
    %299 = vmatpush1.msra.mxu0 %v161
    %300 = vmatprep.subr.mxu0 0.0
    %301 = vmatpush1.msra.mxu0 %v156
    %302 = vmatprep.subr.mxu0 0.0
    %303 = vmatpush2.msra.mxu0 0.0
    %304 = vmatprep.subr.mxu0 0.0
    %305 = vmatpush2.msra.mxu0 0.0
    %306 = vmatprep.subr.mxu0 0.0
    %307 = vmatpush2.msra.mxu0 0.0
    %308 = vmatprep.subr.mxu0 0.0
    %309 = vmatpush2.msra.mxu0 0.0
    %310 = vmatprep.subr.mxu0 0.0
    %311 = vmatpush2.msra.mxu0 0.0
    %312 = vmatprep.subr.mxu0 0.0
    %313 = vmatpush2.msra.mxu0 0.0
    %314 = vmatprep.subr.mxu0 0.0
    %315 = vmatpush2.msra.mxu0 0.0
    %316 = vmatprep.subr.mxu0 0.0
    %317 = vmatpush2.msra.mxu0 0.0
    %318 = vmatprep.subr.mxu0 0.0
    %319 = vmatpush2.msra.mxu0 0.0
    %320 = vmatprep.subr.mxu0 0.0
    %321 = vmatpush2.msra.mxu0 0.0
    %322 = vmatprep.subr.mxu0 0.0
    %323 = vmatpush2.msra.mxu0 0.0
    %324 = vmatprep.subr.mxu0 0.0
    %325 = vmatpush2.msra.mxu0 0.0
    %326 = vmatprep.subr.mxu0 0.0
    %327 = vmatpush2.msra.mxu0 0.0
    %328 = vmatprep.subr.mxu0 0.0
    %329 = vmatpush2.msra.mxu0 0.0
    %330 = vmatprep.subr.mxu0 0.0
    %331 = vmatpush2.msra.mxu0 0.0
    %332 = vmatprep.subr.mxu0 0.0
    %333 = vmatpush2.msra.mxu0 0.0
    %334 = vmatprep.mubr.f32.mxu0 0.0
    %335 = vmatmul.mubr.f32.gmra.mxu0 %v268
    %v336 = vpop.f32.mrf.mxu0
    %v337 = vadd.f32 0.0, %v336
    %v338 = vpop.f32.mrf.mxu0
    %339 = vdwg.mxu0
    %v340 = vld [vmem:[#allocation2 + $0x60] sm:$0xff]
    %vm341 = vcmask 261120
    %v343 = vsel %vm341, %v337, 0
    %345 = vmatprep.subr.mxu0 0.0
    %346 = vmatpush1.msra.mxu0 0.0
    %347 = vmatprep.subr.mxu0 0.0
    %348 = vmatpush1.msra.mxu0 0.0
    %349 = vmatprep.subr.mxu0 0.0
    %350 = vmatpush1.msra.mxu0 0.0
    %351 = vmatprep.subr.mxu0 0.0
    %352 = vmatpush1.msra.mxu0 0.0
    %353 = vmatprep.subr.mxu0 0.0
    %354 = vmatpush1.msra.mxu0 0.0
    %355 = vmatprep.subr.mxu0 0.0
    %356 = vmatpush1.msra.mxu0 0.0
    %357 = vmatprep.subr.mxu0 0.0
    %358 = vmatpush1.msra.mxu0 0.0
    %359 = vmatprep.subr.mxu0 0.0
    %360 = vmatpush1.msra.mxu0 0.0
    %361 = vmatprep.subr.mxu0 0.0
    %362 = vmatpush1.msra.mxu0 0.0
    %363 = vmatprep.subr.mxu0 0.0
    %364 = vmatpush1.msra.mxu0 0.0
    %365 = vmatprep.subr.mxu0 0.0
    %366 = vmatpush1.msra.mxu0 0.0
    %367 = vmatprep.subr.mxu0 0.0
    %368 = vmatpush1.msra.mxu0 0.0
    %369 = vmatprep.subr.mxu0 0.0
    %370 = vmatpush1.msra.mxu0 %v262
    %371 = vmatprep.subr.mxu0 0.0
    %372 = vmatpush1.msra.mxu0 %v257
    %373 = vmatprep.subr.mxu0 0.0
    %374 = vmatpush1.msra.mxu0 %v252
    %375 = vmatprep.subr.mxu0 0.0
    %376 = vmatpush1.msra.mxu0 %v247
    %377 = vmatprep.subr.mxu0 0.0
    %378 = vmatpush2.msra.mxu0 0.0
    %379 = vmatprep.subr.mxu0 0.0
    %380 = vmatpush2.msra.mxu0 0.0
    %381 = vmatprep.subr.mxu0 0.0
    %382 = vmatpush2.msra.mxu0 0.0
    %383 = vmatprep.subr.mxu0 0.0
    %384 = vmatpush2.msra.mxu0 0.0
    %385 = vmatprep.subr.mxu0 0.0
    %386 = vmatpush2.msra.mxu0 0.0
    %387 = vmatprep.subr.mxu0 0.0
    %388 = vmatpush2.msra.mxu0 0.0
    %389 = vmatprep.subr.mxu0 0.0
    %390 = vmatpush2.msra.mxu0 0.0
    %391 = vmatprep.subr.mxu0 0.0
    %392 = vmatpush2.msra.mxu0 0.0
    %393 = vmatprep.subr.mxu0 0.0
    %394 = vmatpush2.msra.mxu0 0.0
    %395 = vmatprep.subr.mxu0 0.0
    %396 = vmatpush2.msra.mxu0 0.0
    %397 = vmatprep.subr.mxu0 0.0
    %398 = vmatpush2.msra.mxu0 0.0
    %399 = vmatprep.subr.mxu0 0.0
    %400 = vmatpush2.msra.mxu0 0.0
    %401 = vmatprep.subr.mxu0 0.0
    %402 = vmatpush2.msra.mxu0 0.0
    %403 = vmatprep.subr.mxu0 0.0
    %404 = vmatpush2.msra.mxu0 0.0
    %405 = vmatprep.subr.mxu0 0.0
    %406 = vmatpush2.msra.mxu0 0.0
    %407 = vmatprep.subr.mxu0 0.0
    %408 = vmatpush2.msra.mxu0 0.0
    %409 = vmatprep.mubr.f32.mxu0 0.0
    %410 = vmatmul.mubr.f32.gmra.mxu0 %v343
    %v411 = vpop.f32.mrf.mxu0
    %v412 = vadd.f32 %v340, %v411
    %v413 = vpop.f32.mrf.mxu0
    %414 = vdwg.mxu0
    %415 = vmax.xlane.f32.xlu0 %v412
    %v416 = vpop.xlane.xlu0 %415
    %v417 = vsub.f32 %v412, %v416
    %v418 = vmul.f32 %v417, 1.442695
    %v419 = vpow.pop %v418
    %420 = vadd.xlane.f32.xlu0 %v419
    %v421 = vpop.xlane.xlu0 %420
    %v422 = vrcp.pop %v421
    %v423 = vmul.f32 %v419, %v422
    %v425 = vsel %vm266, %v423, 0
    %427 = vmatprep.subr.mxu0 0.0
    %428 = vmatpush1.msra.mxu0 0.0
    %429 = vmatprep.subr.mxu0 0.0
    %430 = vmatpush1.msra.mxu0 0.0
    %431 = vmatprep.subr.mxu0 0.0
    %432 = vmatpush1.msra.mxu0 0.0
    %433 = vmatprep.subr.mxu0 0.0
    %434 = vmatpush1.msra.mxu0 0.0
    %435 = vmatprep.subr.mxu0 0.0
    %436 = vmatpush1.msra.mxu0 0.0
    %437 = vmatprep.subr.mxu0 0.0
    %438 = vmatpush1.msra.mxu0 0.0
    %439 = vmatprep.subr.mxu0 0.0
    %440 = vmatpush1.msra.mxu0 0.0
    %441 = vmatprep.subr.mxu0 0.0
    %442 = vmatpush1.msra.mxu0 0.0
    %443 = vmatprep.subr.mxu0 0.0
    %444 = vmatpush1.msra.mxu0 0.0
    %445 = vmatprep.subr.mxu0 0.0
    %446 = vmatpush1.msra.mxu0 0.0
    %447 = vmatprep.subr.mxu0 0.0
    %448 = vmatpush1.msra.mxu0 0.0
    %449 = vmatprep.subr.mxu0 0.0
    %450 = vmatpush1.msra.mxu0 0.0
    %451 = vmatprep.subr.mxu0 0.0
    %452 = vmatpush1.msra.mxu0 0.0
    %453 = vmatprep.subr.mxu0 0.0
    %454 = vmatpush1.msra.mxu0 0.0
    %455 = vmatprep.subr.mxu0 0.0
    %456 = vmatpush1.msra.mxu0 %v161
    %457 = vmatprep.subr.mxu0 0.0
    %458 = vmatpush1.msra.mxu0 %v156
    %459 = vmatprep.subr.mxu0 0.0
    %460 = vmatpush2.msra.mxu0 0.0
    %461 = vmatprep.subr.mxu0 0.0
    %462 = vmatpush2.msra.mxu0 0.0
    %463 = vmatprep.subr.mxu0 0.0
    %464 = vmatpush2.msra.mxu0 0.0
    %465 = vmatprep.subr.mxu0 0.0
    %466 = vmatpush2.msra.mxu0 0.0
    %467 = vmatprep.subr.mxu0 0.0
    %468 = vmatpush2.msra.mxu0 0.0
    %469 = vmatprep.subr.mxu0 0.0
    %470 = vmatpush2.msra.mxu0 0.0
    %471 = vmatprep.subr.mxu0 0.0
    %472 = vmatpush2.msra.mxu0 0.0
    %473 = vmatprep.subr.mxu0 0.0
    %474 = vmatpush2.msra.mxu0 0.0
    %475 = vmatprep.subr.mxu0 0.0
    %476 = vmatpush2.msra.mxu0 0.0
    %477 = vmatprep.subr.mxu0 0.0
    %478 = vmatpush2.msra.mxu0 0.0
    %479 = vmatprep.subr.mxu0 0.0
    %480 = vmatpush2.msra.mxu0 0.0
    %481 = vmatprep.subr.mxu0 0.0
    %482 = vmatpush2.msra.mxu0 0.0
    %483 = vmatprep.subr.mxu0 0.0
    %484 = vmatpush2.msra.mxu0 0.0
    %485 = vmatprep.subr.mxu0 0.0
    %486 = vmatpush2.msra.mxu0 0.0
    %487 = vmatprep.subr.mxu0 0.0
    %488 = vmatpush2.msra.mxu0 0.0
    %489 = vmatprep.subr.mxu0 0.0
    %490 = vmatpush2.msra.mxu0 0.0
    %491 = vmatprep.mubr.f32.mxu0 0.0
    %492 = vmatmul.mubr.f32.gmra.mxu0 %v425
    %v493 = vpop.f32.mrf.mxu0
    %v494 = vadd.f32 0.0, %v493
    %v495 = vpop.f32.mrf.mxu0
    %496 = vdwg.mxu0
    %497 = vst [vmem:[%s2] sm:$0xff] %v494
    // Predicated region
    $region14: #{attention_text_classifier.1} parent=1 // pred_check
      _
    $region15: #{attention_text_classifier.1} parent=1 // pred_check_branch
      %499 = sbr.rel (0) target = $region17
    $region16: #{attention_text_classifier.1} parent=1 // pred_region
      _
    $region17: #{attention_text_classifier.1} parent=1 // pred_fallthru
      _
    // Predicated region
    $region18: #{attention_text_classifier.1} parent=1 // pred_check
      _
    $region19: #{attention_text_classifier.1} parent=1 // pred_check_branch
      %501 = sbr.rel (0) target = $region21
    $region20: #{attention_text_classifier.1} parent=1 // pred_region
      _
    $region21: #{attention_text_classifier.1} parent=1 // pred_fallthru
      _
    %502 = vsyncpa [#allocation3], 1

</llo_original>
